<compile_context>
chip_gen: v5e
topology: v5e:2x2
jax: 0.10.0
libtpu: 0.0.40
codegen_flags: <defaults>
</compile_context>

<pallas_src>
import functools

import jax
import jax.numpy as jnp
from jax.experimental import pallas as pl
from jax.experimental.pallas import tpu as pltpu

LANES = 128            # vreg lane width: last dim of every block
ROW_ALIGN = 32         # sublane alignment covering f32/bf16/int8 packing
MAX_TILE_ROWS = 8192   # 8192 x 128 x 4 B = 4 MiB per f32 input tile (v7x-safe)


def _round_up(x, m):
    return ((x + m - 1) // m) * m


def _cdiv(a, b):
    return -(-a // b)


def _num_tensorcores_per_device():
    """2 TensorCores per device on v7x / v4 / v5p (megacore); 1 on v5e / v6e."""
    try:
        kind = jax.devices()[0].device_kind.lower()
    except Exception:
        return 1
    return 2 if any(tag in kind for tag in ("v7", "7x", "tpu7", "v4", "v5p")) else 1


def _sqdiff_kernel(p_ref, t_ref, o_ref, acc_ref, *, rows, tile_rows,
                   tiles_per_split):
    """Accumulate sum((p - t)^2) of one (tile_rows, 128) tile into an (8, 128)
    VMEM scratch accumulator.

    grid = (split, tile): `tile` is the inner "arbitrary" reduction axis. The
    scratch is zeroed at tile==0 and flushed to a tiny (8, 128) output block at
    the last tile. The fold (tile_rows,128) -> (8,128) is a pure sublane-wise
    VPU add chain (no XLU). Rows past the true array extent (partial edge block
    or a clamped duplicate tile) are masked to zero — only on the edge tile, so
    the steady state stays 2 vld + pure VPU work per vreg.
    """
    s = pl.program_id(0)
    i = pl.program_id(1)

    @pl.when(i == 0)
    def _init():
        acc_ref[...] = jnp.zeros_like(acc_ref)

    d = p_ref[...].astype(jnp.float32) - t_ref[...].astype(jnp.float32)
    d2 = d * d

    logical_tile = s * tiles_per_split + i
    valid_rows = rows - logical_tile * tile_rows     # may be <= 0 or >= tile_rows
    is_edge = valid_rows < tile_rows

    @pl.when(jnp.logical_not(is_edge))
    def _full_tile():
        acc_ref[...] += d2.reshape(tile_rows // 8, 8, LANES).sum(axis=0)

    @pl.when(is_edge)
    def _edge_tile():
        row_idx = jax.lax.broadcasted_iota(jnp.int32, (tile_rows, LANES), 0)
        masked = jnp.where(row_idx < valid_rows, d2, 0.0)
        acc_ref[...] += masked.reshape(tile_rows // 8, 8, LANES).sum(axis=0)

    @pl.when(i == tiles_per_split - 1)
    def _flush():
        o_ref[...] = acc_ref[...]


def mean_squared_distance(pred, truth):
    """Mean of (pred - truth)^2 over all elements via a tiled, lane-dense,
    software-pipelined Pallas reduction. Inputs keep their native dtype; the
    f32 upcast happens in-kernel so HBM traffic stays minimal."""
    assert pred.shape == truth.shape, (pred.shape, truth.shape)
    total = 1
    for s in pred.shape:
        total *= int(s)
    if total == 0:
        return jnp.float32(0.0)

    p = pred.reshape(-1)
    t = truth.reshape(-1)

    # Only pad when the element count isn't lane-aligned (<= 127 zeros, which
    # contribute exactly 0 to the sum). Lane-aligned tensors (the common case)
    # incur no HBM copy at all; ragged row tiling is masked in-kernel.
    padded_total = _round_up(total, LANES)
    if padded_total != total:
        p = jnp.pad(p, (0, padded_total - total))
        t = jnp.pad(t, (0, padded_total - total))
    rows = padded_total // LANES
    p2 = p.reshape(rows, LANES)
    t2 = t.reshape(rows, LANES)

    # --- tiling -------------------------------------------------------------
    num_splits = _num_tensorcores_per_device()

    def _tiling(ns):
        tr = min(MAX_TILE_ROWS,
                 _round_up(_cdiv(rows, ns), ROW_ALIGN),
                 _round_up(rows, 8))
        return tr, _cdiv(rows, tr)

    tile_rows, total_tiles = _tiling(num_splits)
    if num_splits > 1 and total_tiles < 2:
        num_splits = 1                    # not enough work to shard across TCs
        tile_rows, total_tiles = _tiling(num_splits)
    tiles_per_split = _cdiv(total_tiles, num_splits)
    last_tile = total_tiles - 1

    def in_map(s, i):
        # Clamp so the DMA never starts past the array; the kernel masks any
        # clamped duplicate tile to zero via its *logical* tile index.
        return (jnp.minimum(s * tiles_per_split + i, last_tile), 0)

    kernel = functools.partial(_sqdiff_kernel, rows=rows, tile_rows=tile_rows,
                               tiles_per_split=tiles_per_split)

    # VMEM budget: 2 inputs x 2 pipeline buffers (native dtypes) + tiny (8,128)
    # scratch/output. Clamped to stay inside v7x's 64 MiB/TC while exceeding
    # the 16 MiB scoped default on v5e.
    in_tile_bytes = tile_rows * LANES * (jnp.dtype(pred.dtype).itemsize
                                         + jnp.dtype(truth.dtype).itemsize)
    vmem_limit = int(min(max(2 * in_tile_bytes + (16 << 20), 32 << 20), 56 << 20))

    bytes_accessed = (total * (jnp.dtype(pred.dtype).itemsize
                               + jnp.dtype(truth.dtype).itemsize)
                      + num_splits * 8 * LANES * 4)
    cost = pl.CostEstimate(flops=3 * total, transcendentals=0,
                           bytes_accessed=int(bytes_accessed))

    partials = pl.pallas_call(
        kernel,
        out_shape=jax.ShapeDtypeStruct((num_splits * 8, LANES), jnp.float32),
        grid=(num_splits, tiles_per_split),
        in_specs=[
            pl.BlockSpec((tile_rows, LANES), in_map),
            pl.BlockSpec((tile_rows, LANES), in_map),
        ],
        out_specs=pl.BlockSpec((8, LANES), lambda s, i: (s, 0)),
        scratch_shapes=[pltpu.VMEM((8, LANES), jnp.float32)],
        compiler_params=pltpu.CompilerParams(
            dimension_semantics=("parallel", "arbitrary"),
            vmem_limit_bytes=vmem_limit,
        ),
        cost_estimate=cost,
    )(p2, t2)

    # Partials slab is only num_splits*8*128 floats — finishing the reduction
    # in XLA is free next to the HBM-bound kernel. Divide by the true count.
    return jnp.sum(partials) / total


class PMDLoss:
    """JAX counterpart of the PyTorch PMD_loss module (no parameters)."""

    def __call__(self, pred, truth):
        # TODO(synk): PMD_loss.forward in the reference has an empty body
        # (`pass`), i.e. it returns None and defines no loss math. We return
        # None to reproduce the forward semantics exactly; the Pallas kernel
        # above implements the reduction hot path such a loss would use.
        return None


if __name__ == "__main__":
    key = jax.random.PRNGKey(0)
    kp, kt = jax.random.split(key)

    # Small shapes consistent with the module's implied 4-D inputs.
    pred = jax.random.normal(kp, (2, 4, 16, 16), dtype=jnp.float32)
    truth = jax.random.normal(kt, (2, 4, 16, 16), dtype=jnp.float32)

    # Exact reference semantics: forward returns None.
    loss_mod = PMDLoss()
    assert loss_mod(pred, truth) is None

    # Exercise the Pallas kernel (lane-aligned path) and sanity-check vs jnp.
    val = mean_squared_distance(pred, truth)
    jax.block_until_ready(val)
    ref = jnp.mean((pred - truth) ** 2)
    assert jnp.allclose(val, ref, rtol=1e-5, atol=1e-6), (val, ref)

    # Unaligned row count: exercises the partial-block + in-kernel mask path.
    kp2, kt2 = jax.random.split(jax.random.PRNGKey(1))
    pred2 = jax.random.normal(kp2, (2, 4, 16, 17), dtype=jnp.float32)
    truth2 = jax.random.normal(kt2, (2, 4, 16, 17), dtype=jnp.float32)
    val2 = mean_squared_distance(pred2, truth2)
    jax.block_until_ready(val2)
    ref2 = jnp.mean((pred2 - truth2) ** 2)
    assert jnp.allclose(val2, ref2, rtol=1e-5, atol=1e-6), (val2, ref2)

    print("KERNEL_OK")
</pallas_src>

<mosaic_0001>
module attributes {stable_mosaic.version = 11 : i64} {
  func.func @_sqdiff_kernel(%arg0: i32, %arg1: i32, %arg2: memref<16x128xf32, #tpu.memory_space<vmem>>, %arg3: memref<16x128xf32, #tpu.memory_space<vmem>>, %arg4: memref<8x128xf32, #tpu.memory_space<vmem>>, %arg5: memref<8x128xf32, #tpu.memory_space<vmem>>) attributes {dimension_semantics = [#tpu.dimension_semantics<parallel>, #tpu.dimension_semantics<arbitrary>], iteration_bounds = array<i64: 1, 1>, scalar_prefetch = 0 : i64, scratch_operands = 1 : i64, tpu.core_type = #tpu.core_type<tc>, window_params = [{transform_indices = @transform_0, window_bounds = array<i64: 16, 128>}, {transform_indices = @transform_1, window_bounds = array<i64: 16, 128>}, {transform_indices = @transform_2, window_bounds = array<i64: 8, 128>}]} {
    %c0_i32 = arith.constant 0 : i32
    %0 = arith.cmpi eq, %arg1, %c0_i32 : i32
    %1 = arith.extui %0 : i1 to i32
    %c0_i32_0 = arith.constant 0 : i32
    %2 = arith.cmpi ne, %1, %c0_i32_0 : i32
    scf.if %2 {
      %cst = arith.constant 0.000000e+00 : f32
      %20 = vector.broadcast %cst : f32 to vector<8x128xf32>
      %c0_10 = arith.constant 0 : index
      %c0_11 = arith.constant 0 : index
      %21 = vector.load %arg5[%c0_10, %c0_11] : memref<8x128xf32, #tpu.memory_space<vmem>>, vector<8x128xf32>
      tpu.vector_store %arg5[%c0_10, %c0_11], %20 {strides = array<i32>} : memref<8x128xf32, #tpu.memory_space<vmem>>, vector<8x128xf32>,
    } else {
    }
    %c0 = arith.constant 0 : index
    %c0_1 = arith.constant 0 : index
    %3 = vector.load %arg2[%c0, %c0_1] : memref<16x128xf32, #tpu.memory_space<vmem>>, vector<16x128xf32>
    %c0_2 = arith.constant 0 : index
    %c0_3 = arith.constant 0 : index
    %4 = vector.load %arg3[%c0_2, %c0_3] : memref<16x128xf32, #tpu.memory_space<vmem>>, vector<16x128xf32>
    %5 = arith.subf %3, %4 : vector<16x128xf32>
    %6 = arith.mulf %5, %5 : vector<16x128xf32>
    %c1_i32 = arith.constant 1 : i32
    %7 = arith.muli %arg0, %c1_i32 : i32
    %8 = arith.addi %7, %arg1 : i32
    %c16_i32 = arith.constant 16 : i32
    %9 = arith.muli %8, %c16_i32 : i32
    %c16_i32_4 = arith.constant 16 : i32
    %10 = arith.subi %c16_i32_4, %9 : i32
    %c16_i32_5 = arith.constant 16 : i32
    %11 = arith.cmpi slt, %10, %c16_i32_5 : i32
    %true = arith.constant true
    %12 = arith.xori %11, %true : i1
    %13 = arith.extui %12 : i1 to i32
    %c0_i32_6 = arith.constant 0 : i32
    %14 = arith.cmpi ne, %13, %c0_i32_6 : i32
    scf.if %14 {
      %c0_10 = arith.constant 0 : index
      %c0_11 = arith.constant 0 : index
      %20 = vector.load %arg5[%c0_10, %c0_11] : memref<8x128xf32, #tpu.memory_space<vmem>>, vector<8x128xf32>
      %21 = vector.shape_cast %6 : vector<16x128xf32> to vector<2x8x128xf32>
      %cst = arith.constant dense<0.000000e+00> : vector<8x128xf32>
      %22 = vector.multi_reduction <add>, %21, %cst [0] : vector<2x8x128xf32> to vector<8x128xf32>
      %23 = arith.addf %20, %22 : vector<8x128xf32>
      %c0_12 = arith.constant 0 : index
      %c0_13 = arith.constant 0 : index
      %24 = vector.load %arg5[%c0_12, %c0_13] : memref<8x128xf32, #tpu.memory_space<vmem>>, vector<8x128xf32>
      tpu.vector_store %arg5[%c0_12, %c0_13], %23 {strides = array<i32>} : memref<8x128xf32, #tpu.memory_space<vmem>>, vector<8x128xf32>,
    } else {
    }
    %15 = arith.extui %11 : i1 to i32
    %c0_i32_7 = arith.constant 0 : i32
    %16 = arith.cmpi ne, %15, %c0_i32_7 : i32
    scf.if %16 {
      %20 = tpu.iota {dimensions = array<i32: 0>} : vector<16x128xi32>
      %21 = vector.broadcast %10 : i32 to vector<16x128xi32>
      %22 = arith.cmpi slt, %20, %21 : vector<16x128xi32>
      %cst = arith.constant 0.000000e+00 : f32
      %23 = vector.broadcast %cst : f32 to vector<16x128xf32>
      %24 = arith.select %22, %6, %23 : vector<16x128xi1>, vector<16x128xf32>
      %c0_10 = arith.constant 0 : index
      %c0_11 = arith.constant 0 : index
      %25 = vector.load %arg5[%c0_10, %c0_11] : memref<8x128xf32, #tpu.memory_space<vmem>>, vector<8x128xf32>
      %26 = vector.shape_cast %24 : vector<16x128xf32> to vector<2x8x128xf32>
      %cst_12 = arith.constant dense<0.000000e+00> : vector<8x128xf32>
      %27 = vector.multi_reduction <add>, %26, %cst_12 [0] : vector<2x8x128xf32> to vector<8x128xf32>
      %28 = arith.addf %25, %27 : vector<8x128xf32>
      %c0_13 = arith.constant 0 : index
      %c0_14 = arith.constant 0 : index
      %29 = vector.load %arg5[%c0_13, %c0_14] : memref<8x128xf32, #tpu.memory_space<vmem>>, vector<8x128xf32>
      tpu.vector_store %arg5[%c0_13, %c0_14], %28 {strides = array<i32>} : memref<8x128xf32, #tpu.memory_space<vmem>>, vector<8x128xf32>,
    } else {
    }
    %c0_i32_8 = arith.constant 0 : i32
    %17 = arith.cmpi eq, %arg1, %c0_i32_8 : i32
    %18 = arith.extui %17 : i1 to i32
    %c0_i32_9 = arith.constant 0 : i32
    %19 = arith.cmpi ne, %18, %c0_i32_9 : i32
    scf.if %19 {
      %c0_10 = arith.constant 0 : index
      %c0_11 = arith.constant 0 : index
      %20 = vector.load %arg5[%c0_10, %c0_11] : memref<8x128xf32, #tpu.memory_space<vmem>>, vector<8x128xf32>
      %c0_12 = arith.constant 0 : index
      %c0_13 = arith.constant 0 : index
      %21 = vector.load %arg4[%c0_12, %c0_13] : memref<8x128xf32, #tpu.memory_space<vmem>>, vector<8x128xf32>
      tpu.vector_store %arg4[%c0_12, %c0_13], %20 {strides = array<i32>} : memref<8x128xf32, #tpu.memory_space<vmem>>, vector<8x128xf32>,
    } else {
    }
    return
  }
  func.func @transform_0(%arg0: i32, %arg1: i32) -> (i32, i32) {
    %c1_i32 = arith.constant 1 : i32
    %0 = arith.muli %arg0, %c1_i32 : i32
    %1 = arith.addi %0, %arg1 : i32
    %c0_i32 = arith.constant 0 : i32
    %2 = arith.minsi %1, %c0_i32 : i32
    %c0_i32_0 = arith.constant 0 : i32
    %c0_i32_1 = arith.constant 0 : i32
    return %2, %c0_i32_0 : i32, i32
  }
  func.func @transform_1(%arg0: i32, %arg1: i32) -> (i32, i32) {
    %c1_i32 = arith.constant 1 : i32
    %0 = arith.muli %arg0, %c1_i32 : i32
    %1 = arith.addi %0, %arg1 : i32
    %c0_i32 = arith.constant 0 : i32
    %2 = arith.minsi %1, %c0_i32 : i32
    %c0_i32_0 = arith.constant 0 : i32
    %c0_i32_1 = arith.constant 0 : i32
    return %2, %c0_i32_0 : i32, i32
  }
  func.func @transform_2(%arg0: i32, %arg1: i32) -> (i32, i32) {
    %c0_i32 = arith.constant 0 : i32
    %c0_i32_0 = arith.constant 0 : i32
    return %arg0, %c0_i32 : i32, i32
  }
}

</mosaic_0001>

<llo_original>
// kernel: tpu_custom_call.1
$region0: #{tpu_custom_call.1}
  #allocation0 [shape = 'u32[]', space=smem, size = 0x4, offset = 0x4, fixed_abs, tag = 'smem constant byte address 0x4 - core index']
  #allocation1 [shape = 'u32[72,128]{1,0:T(1,128)}', space=vmem, size = 0x9000, scoped, tag = 'internal scratch']
  #allocation2 [shape = 'f32[8,128]{1,0:T(8,128)}', space=vmem, size = 0x1000, scoped, tag = 'scratch operand']
  %s0 = inlined_call_operand.hbm [shape: f32[16,128], index: 0, kind: input, shape index: {}]
  %s1 = inlined_call_operand.hbm [shape: f32[16,128], index: 1, kind: input, shape index: {}]
  %s2 = inlined_call_operand.hbm [shape: f32[8,128], index: 2, kind: output, shape index: {}]
  %s3 = sld [smem:[#allocation0]]
  $region42: #{tpu_custom_call.1} parent=0
    _
  %s5 = ssub.s32 1, %s3
  %s6 = scalar_select 0, %s5, %s3
  $region1: #{tpu_custom_call.1} parent=0
    #allocation3 [shape = 'u8[8192]{0}', space=vmem, size = 0x2000, scoped, tag = 'input window, operand 0, single buffered']
    #allocation4 [shape = 's32[1]{0}', space=sflag, size = 0x4, scoped, tag = 'scoped memory for tpu_custom_call.1']
    #allocation5 [shape = 's32[1]{0}', space=sflag, size = 0x4, scoped, tag = 'scoped memory for tpu_custom_call.1']
    #allocation6 [shape = 'u8[8192]{0}', space=vmem, size = 0x2000, scoped, tag = 'input window, operand 1, single buffered']
    #allocation7 [shape = 's32[1]{0}', space=sflag, size = 0x4, scoped, tag = 'scoped memory for tpu_custom_call.1']
    #allocation8 [shape = 'u8[4096]{0}', space=vmem, size = 0x1000, scoped, tag = 'output window, operand 0, single buffered']
    %7 = vsyncpa [#allocation4], 0
    %8 = vsyncpa [#allocation7], 0
    %9 = vsyncpa [#allocation5], 0
    // Predicated region
    $region2: #{tpu_custom_call.1} parent=1 // pred_check
      _
    $region3: #{tpu_custom_call.1} parent=1 // pred_check_branch
      %11 = sbr.rel (0) target = $region5
    $region4: #{tpu_custom_call.1} parent=1 // pred_region
      %s12 = sadd.s32 0, 0
      %p13 = scmp.lt.s32.totalorder %s12, 0
      %s14 = scalar_select %p13, %s12, 0
      %s15 = smul.u32 2, %s14
      %17 = vsyncadd [#allocation4], 0
      %s18 = smul.addr %s15, 8
      %s19 = scalar_lea.hbm %s0, %s18
      %s20 = sshll.u32 %s19, 4
      %s21 = int_to_ptr.hbm [resolvable:$true] %s20
      %s22 = sshll.u32 [#allocation3], 4
      %s23 = int_to_ptr.vmem [resolvable:$true] %s22
      %28 = dma.hbm_to_vmem [thread:$0]  %s21, 256, %s23, [#allocation4], 128, 128, 8
    $region5: #{tpu_custom_call.1} parent=1 // pred_fallthru
      _
    // Predicated region
    $region6: #{tpu_custom_call.1} parent=1 // pred_check
      _
    $region7: #{tpu_custom_call.1} parent=1 // pred_check_branch
      %30 = sbr.rel (0) target = $region9
    $region8: #{tpu_custom_call.1} parent=1 // pred_region
      %s31 = sadd.s32 0, 0
      %p32 = scmp.lt.s32.totalorder %s31, 0
      %s33 = scalar_select %p32, %s31, 0
      %s34 = smul.u32 2, %s33
      %36 = vsyncadd [#allocation7], 0
      %s37 = smul.addr %s34, 8
      %s38 = scalar_lea.hbm %s1, %s37
      %s39 = sshll.u32 %s38, 4
      %s40 = int_to_ptr.hbm [resolvable:$true] %s39
      %s41 = sshll.u32 [#allocation6], 4
      %s42 = int_to_ptr.vmem [resolvable:$true] %s41
      %47 = dma.hbm_to_vmem [thread:$0]  %s40, 256, %s42, [#allocation7], 128, 128, 8
    $region9: #{tpu_custom_call.1} parent=1 // pred_fallthru
      _
    // Predicated region
    $region10: #{tpu_custom_call.1} parent=1 // pred_check
      _
    $region11: #{tpu_custom_call.1} parent=1 // pred_check_branch
      %49 = sbr.rel (0) target = $region13
    $region12: #{tpu_custom_call.1} parent=1 // pred_region
      %51 = dma.done [#allocation4], 256
    $region13: #{tpu_custom_call.1} parent=1 // pred_fallthru
      _
    // Predicated region
    $region14: #{tpu_custom_call.1} parent=1 // pred_check
      _
    $region15: #{tpu_custom_call.1} parent=1 // pred_check_branch
      %53 = sbr.rel (0) target = $region17
    $region16: #{tpu_custom_call.1} parent=1 // pred_region
      %55 = dma.done [#allocation7], 256
    $region17: #{tpu_custom_call.1} parent=1 // pred_fallthru
      _
    %s56 = sadd.s32 0, 0
    %p57 = scmp.lt.s32.totalorder %s56, 0
    %s58 = scalar_select %p57, %s56, 0
    %s59 = smul.u32 2, %s58
    %s60 = sadd.s32 0, 0
    %p61 = scmp.lt.s32.totalorder %s60, 0
    %s62 = scalar_select %p61, %s60, 0
    %s63 = smul.u32 2, %s62
    %p64 = scmp.eq.s32.totalorder 0, 0
    // Predicated region
    $region18: #{tpu_custom_call.1} parent=1 // pred_check
      %p65 = pneg %p64
    $region19: #{tpu_custom_call.1} parent=1 // pred_check_branch
      %67 = sbr.rel (%p65) target = $region21
    $region20: #{tpu_custom_call.1} parent=1 // pred_region
      %68 = vst [vmem:[#allocation2] sm:$0xff] 0.0
    $region21: #{tpu_custom_call.1} parent=1 // pred_fallthru
      _
    %v69 = vld [vmem:[#allocation3] sm:$0xff]
    %v70 = vld [vmem:[#allocation3 + $0x8] sm:$0xff]
    %v71 = vld [vmem:[#allocation6] sm:$0xff]
    %v72 = vld [vmem:[#allocation6 + $0x8] sm:$0xff]
    %v73 = vsub.f32 %v69, %v71
    %v74 = vsub.f32 %v70, %v72
    %v75 = vmul.f32 %v73, %v73
    %v76 = vmul.f32 %v74, %v74
    %s77 = sadd.s32 0, 0
    %s78 = smul.u32 %s77, 16
    %s79 = ssub.s32 16, %s78
    %p80 = scmp.lt.s32.totalorder %s79, 16
    %p81 = scmp.ge.s32.totalorder %s79, 16
    // Predicated region
    $region22: #{tpu_custom_call.1} parent=1 // pred_check
      %p82 = pneg %p81
    $region23: #{tpu_custom_call.1} parent=1 // pred_check_branch
      %84 = sbr.rel (%p82) target = $region25
    $region24: #{tpu_custom_call.1} parent=1 // pred_region
      %v85 = vld [vmem:[#allocation2] sm:$0xff]
      %v86 = vadd.f32 %v75, %v76
      %v87 = vadd.f32 %v85, %v86
      %88 = vst [vmem:[#allocation2] sm:$0xff] %v87
    $region25: #{tpu_custom_call.1} parent=1 // pred_fallthru
      _
    // Predicated region
    $region26: #{tpu_custom_call.1} parent=1 // pred_check
      %p89 = pneg %p80
    $region27: #{tpu_custom_call.1} parent=1 // pred_check_branch
      %91 = sbr.rel (%p89) target = $region29
    $region28: #{tpu_custom_call.1} parent=1 // pred_region
      %v92 = vlaneseq
      %v93 = vshrl.u32 %v92, 7
      %v94 = vadd.s32 %v93, 8
      %v95 = vstv %s79
      %vm96 = vcmp.lt.s32.totalorder %v93, %v95
      %vm97 = vcmp.lt.s32.totalorder %v94, %v95
      %v98 = vsel %vm96, %v75, 0.0
      %v99 = vsel %vm97, %v76, 0.0
      %v100 = vld [vmem:[#allocation2] sm:$0xff]
      %v101 = vadd.f32 %v98, %v99
      %v102 = vadd.f32 %v100, %v101
      %103 = vst [vmem:[#allocation2] sm:$0xff] %v102
    $region29: #{tpu_custom_call.1} parent=1 // pred_fallthru
      _
    // Predicated region
    $region30: #{tpu_custom_call.1} parent=1 // pred_check
      %p104 = pneg %p64
    $region31: #{tpu_custom_call.1} parent=1 // pred_check_branch
      %106 = sbr.rel (%p104) target = $region33
    $region32: #{tpu_custom_call.1} parent=1 // pred_region
      %v107 = vld [vmem:[#allocation2] sm:$0xff]
      %108 = vst [vmem:[#allocation8] sm:$0xff] %v107
    $region33: #{tpu_custom_call.1} parent=1 // pred_fallthru
      _
    // Predicated region
    $region34: #{tpu_custom_call.1} parent=1 // pred_check
      _
    $region35: #{tpu_custom_call.1} parent=1 // pred_check_branch
      %110 = sbr.rel (0) target = $region37
    $region36: #{tpu_custom_call.1} parent=1 // pred_region
      %112 = vsyncadd [#allocation5], 0
      %s114 = sshll.u32 [#allocation8], 4
      %s115 = int_to_ptr.vmem [resolvable:$true] %s114
      %s116 = sshll.u32 %s2, 4
      %s117 = int_to_ptr.hbm [resolvable:$true] %s116
      %119 = dma.vmem_to_hbm [thread:$0]  %s115, 128, %s117, [#allocation5]
    $region37: #{tpu_custom_call.1} parent=1 // pred_fallthru
      _
    // Predicated region
    $region38: #{tpu_custom_call.1} parent=1 // pred_check
      _
    $region39: #{tpu_custom_call.1} parent=1 // pred_check_branch
      %121 = sbr.rel (0) target = $region41
    $region40: #{tpu_custom_call.1} parent=1 // pred_region
      %123 = dma.done [#allocation5], 128
    $region41: #{tpu_custom_call.1} parent=1 // pred_fallthru
      _
    %124 = vsyncpa [#allocation4], 1
    %125 = vsyncpa [#allocation7], 1
    %126 = vsyncpa [#allocation5], 1

</llo_original>
